<compile_context>
chip_gen: v7x
topology: tpu7x:2x2x1
jax: 0.10.0
libtpu: 0.0.40
codegen_flags: <defaults>
</compile_context>

<pallas_src>
import functools
import math

import jax
import jax.numpy as jnp
from jax.experimental import pallas as pl
from jax.experimental.pallas import tpu as pltpu  # noqa: F401  (kept for future tiled path)


def _stack_gcn_kernel(adj_ref, x_ref, w_ref, b_ref, o_ref, *, n_layers, f_out_final):
    """Fused forward: (n_layers-1) x [adj@(h@W)+b -> ReLU], then final GCN."""
    # adj is layer-invariant at this size: load once and reuse from vregs.
    adj = adj_ref[...]
    h = x_ref[...]

    for layer in range(n_layers):
        # Static (trace-time) slices into the packed parameter slabs: free.
        w = w_ref[layer]                       # (F_pad, F_pad)
        b = b_ref[pl.ds(layer, 1), :]          # (1, F_pad), broadcasts over nodes

        # Same op order as the reference: support = h @ W, out = adj @ support.
        support = jnp.dot(h, w, preferred_element_type=jnp.float32)
        out = jnp.dot(adj, support, preferred_element_type=jnp.float32)
        out = out + b
        if layer < n_layers - 1:
            out = jnp.maximum(out, 0.0)        # ReLU on all but the last layer
        h = out

    o_ref[...] = h[:, :f_out_final].astype(o_ref.dtype)


def stack_gcn_forward(x, adj, params, dropout=0.0, training=False):
    """StackGCN.forward as a single fused Pallas kernel (eval-mode dropout)."""
    del dropout, training  # eval mode: dropout is identity (see TODO above)
    n, f_in0 = x.shape
    n_layers = len(params)
    f_out_final = params[-1][0].shape[1]

    # Common padded feature width so all layers share one weight/bias slab.
    # Zero padding is exact: padded W rows/cols and padded bias entries are 0,
    # so padded activation columns stay identically 0 through every layer.
    f_pad = max([f_in0] + [w.shape[1] for w, _ in params])

    x_p = jnp.zeros((n, f_pad), x.dtype).at[:, :f_in0].set(x)
    w_slab = jnp.zeros((n_layers, f_pad, f_pad), jnp.float32)
    b_slab = jnp.zeros((n_layers, f_pad), jnp.float32)
    for l, (w, b) in enumerate(params):
        fi, fo = w.shape
        w_slab = w_slab.at[l, :fi, :fo].set(w)
        b_slab = b_slab.at[l, :fo].set(b)

    kernel = functools.partial(
        _stack_gcn_kernel, n_layers=n_layers, f_out_final=f_out_final)

    # Full-array blocks (block_shape == array shape), so the (8,128) tiling
    # constraint is automatically satisfied even for odd feature widths.
    return pl.pallas_call(
        kernel,
        out_shape=jax.ShapeDtypeStruct((n, f_out_final), x.dtype),
        in_specs=[
            pl.BlockSpec((n, n), lambda: (0, 0)),
            pl.BlockSpec((n, f_pad), lambda: (0, 0)),
            pl.BlockSpec((n_layers, f_pad, f_pad), lambda: (0, 0, 0)),
            pl.BlockSpec((n_layers, f_pad), lambda: (0, 0)),
        ],
        out_specs=pl.BlockSpec((n, f_out_final), lambda: (0, 0)),
    )(adj, x_p, w_slab, b_slab)


def init_stack_gcn_params(key, input_shape, output_shape, n_layers):
    """Matches GraphConvolution.reset_parameters: weight, bias ~ U(-stdv, stdv)
    with stdv = 1/sqrt(out_features)."""
    hidden_shape = (input_shape + output_shape) // 2
    layers = [input_shape] + [hidden_shape] * (n_layers - 1) + [output_shape]
    params = []
    for f_in, f_out in zip(layers[:-1], layers[1:]):
        key, kw, kb = jax.random.split(key, 3)
        stdv = 1.0 / math.sqrt(f_out)
        w = jax.random.uniform(kw, (f_in, f_out), jnp.float32, -stdv, stdv)
        b = jax.random.uniform(kb, (f_out,), jnp.float32, -stdv, stdv)
        params.append((w, b))
    return params


if __name__ == "__main__":
    key = jax.random.PRNGKey(0)
    k_x, k_adj, k_p = jax.random.split(key, 3)

    # Small shapes consistent with the module: N nodes, feature dims 32 -> 16.
    N = 8
    input_shape, output_shape, n_layers = 32, 16, 3

    x = jax.random.normal(k_x, (N, input_shape), jnp.float32)

    # Dense symmetric-normalized adjacency with self loops.
    a = (jax.random.uniform(k_adj, (N, N)) < 0.4).astype(jnp.float32)
    a = jnp.maximum(a, a.T) + jnp.eye(N, dtype=jnp.float32)
    deg = jnp.sum(a, axis=1)
    d_inv_sqrt = 1.0 / jnp.sqrt(deg)
    adj = a * d_inv_sqrt[:, None] * d_inv_sqrt[None, :]

    params = init_stack_gcn_params(k_p, input_shape, output_shape, n_layers)

    out = stack_gcn_forward(x, adj, params, dropout=0.0, training=False)
    out = jax.block_until_ready(out)

    # Pure-JAX reference check of the fused kernel path (matches the PyTorch
    # forward: support = h @ W, out = adj @ support, + bias, ReLU except last).
    def ref_forward(x, adj, params):
        h = x
        for i, (w, b) in enumerate(params):
            h = adj @ (h @ w) + b
            if i < len(params) - 1:
                h = jnp.maximum(h, 0.0)
        return h

    ref = ref_forward(x, adj, params)
    assert out.shape == (N, output_shape)
    assert jnp.allclose(out, ref, atol=1e-5, rtol=1e-5)
    print("KERNEL_OK")
</pallas_src>

<mosaic_0001>
module attributes {stable_mosaic.version = 11 : i64} {
  func.func @_stack_gcn_kernel(%arg0: memref<8x8xf32, #tpu.memory_space<vmem>>, %arg1: memref<8x32xf32, #tpu.memory_space<vmem>>, %arg2: memref<3x32x32xf32, #tpu.memory_space<vmem>>, %arg3: memref<3x32xf32, #tpu.memory_space<vmem>>, %arg4: memref<8x16xf32, #tpu.memory_space<vmem>>) attributes {dimension_semantics = [], scalar_prefetch = 0 : i64, scratch_operands = 0 : i64, tpu.core_type = #tpu.core_type<tc>} {
    %c0 = arith.constant 0 : index
    %c0_0 = arith.constant 0 : index
    %0 = vector.load %arg0[%c0, %c0_0] : memref<8x8xf32, #tpu.memory_space<vmem>>, vector<8x8xf32>
    %c0_1 = arith.constant 0 : index
    %c0_2 = arith.constant 0 : index
    %1 = vector.load %arg1[%c0_1, %c0_2] : memref<8x32xf32, #tpu.memory_space<vmem>>, vector<8x32xf32>
    %c0_3 = arith.constant 0 : index
    %c0_4 = arith.constant 0 : index
    %c0_5 = arith.constant 0 : index
    %2 = vector.load %arg2[%c0_3, %c0_4, %c0_5] : memref<3x32x32xf32, #tpu.memory_space<vmem>>, vector<1x32x32xf32>
    %3 = vector.shape_cast %2 : vector<1x32x32xf32> to vector<32x32xf32>
    %c0_6 = arith.constant 0 : index
    %c0_7 = arith.constant 0 : index
    %4 = vector.load %arg3[%c0_6, %c0_7] : memref<3x32xf32, #tpu.memory_space<vmem>>, vector<1x32xf32>
    %cst = arith.constant dense<0.000000e+00> : vector<8x32xf32>
    %5 = tpu.matmul %1, %3, %cst {dimension_numbers = #tpu.dot_dimension_numbers<[1], [0], [0], [1], [0, 0, 1, 1], [], []>} : vector<8x32xf32>, vector<32x32xf32>, vector<8x32xf32> -> vector<8x32xf32>
    %cst_8 = arith.constant dense<0.000000e+00> : vector<8x32xf32>
    %6 = tpu.matmul %0, %5, %cst_8 {dimension_numbers = #tpu.dot_dimension_numbers<[1], [0], [0], [1], [0, 0, 1, 1], [], []>} : vector<8x8xf32>, vector<8x32xf32>, vector<8x32xf32> -> vector<8x32xf32>
    %7 = vector.broadcast %4 : vector<1x32xf32> to vector<8x32xf32>
    %8 = arith.addf %6, %7 : vector<8x32xf32>
    %cst_9 = arith.constant 0.000000e+00 : f32
    %9 = vector.broadcast %cst_9 : f32 to vector<8x32xf32>
    %10 = arith.maximumf %8, %9 : vector<8x32xf32>
    %c1 = arith.constant 1 : index
    %c0_10 = arith.constant 0 : index
    %c0_11 = arith.constant 0 : index
    %11 = vector.load %arg2[%c1, %c0_10, %c0_11] : memref<3x32x32xf32, #tpu.memory_space<vmem>>, vector<1x32x32xf32>
    %12 = vector.shape_cast %11 : vector<1x32x32xf32> to vector<32x32xf32>
    %c1_12 = arith.constant 1 : index
    %c0_13 = arith.constant 0 : index
    %13 = vector.load %arg3[%c1_12, %c0_13] : memref<3x32xf32, #tpu.memory_space<vmem>>, vector<1x32xf32>
    %cst_14 = arith.constant dense<0.000000e+00> : vector<8x32xf32>
    %14 = tpu.matmul %10, %12, %cst_14 {dimension_numbers = #tpu.dot_dimension_numbers<[1], [0], [0], [1], [0, 0, 1, 1], [], []>} : vector<8x32xf32>, vector<32x32xf32>, vector<8x32xf32> -> vector<8x32xf32>
    %cst_15 = arith.constant dense<0.000000e+00> : vector<8x32xf32>
    %15 = tpu.matmul %0, %14, %cst_15 {dimension_numbers = #tpu.dot_dimension_numbers<[1], [0], [0], [1], [0, 0, 1, 1], [], []>} : vector<8x8xf32>, vector<8x32xf32>, vector<8x32xf32> -> vector<8x32xf32>
    %16 = vector.broadcast %13 : vector<1x32xf32> to vector<8x32xf32>
    %17 = arith.addf %15, %16 : vector<8x32xf32>
    %cst_16 = arith.constant 0.000000e+00 : f32
    %18 = vector.broadcast %cst_16 : f32 to vector<8x32xf32>
    %19 = arith.maximumf %17, %18 : vector<8x32xf32>
    %c2 = arith.constant 2 : index
    %c0_17 = arith.constant 0 : index
    %c0_18 = arith.constant 0 : index
    %20 = vector.load %arg2[%c2, %c0_17, %c0_18] : memref<3x32x32xf32, #tpu.memory_space<vmem>>, vector<1x32x32xf32>
    %21 = vector.shape_cast %20 : vector<1x32x32xf32> to vector<32x32xf32>
    %c2_19 = arith.constant 2 : index
    %c0_20 = arith.constant 0 : index
    %22 = vector.load %arg3[%c2_19, %c0_20] : memref<3x32xf32, #tpu.memory_space<vmem>>, vector<1x32xf32>
    %cst_21 = arith.constant dense<0.000000e+00> : vector<8x32xf32>
    %23 = tpu.matmul %19, %21, %cst_21 {dimension_numbers = #tpu.dot_dimension_numbers<[1], [0], [0], [1], [0, 0, 1, 1], [], []>} : vector<8x32xf32>, vector<32x32xf32>, vector<8x32xf32> -> vector<8x32xf32>
    %cst_22 = arith.constant dense<0.000000e+00> : vector<8x32xf32>
    %24 = tpu.matmul %0, %23, %cst_22 {dimension_numbers = #tpu.dot_dimension_numbers<[1], [0], [0], [1], [0, 0, 1, 1], [], []>} : vector<8x8xf32>, vector<8x32xf32>, vector<8x32xf32> -> vector<8x32xf32>
    %25 = vector.broadcast %22 : vector<1x32xf32> to vector<8x32xf32>
    %26 = arith.addf %24, %25 : vector<8x32xf32>
    %27 = vector.extract_strided_slice %26 {offsets = [0, 0], sizes = [8, 16], strides = [1, 1]} : vector<8x32xf32> to vector<8x16xf32>
    %c0_23 = arith.constant 0 : index
    %c0_24 = arith.constant 0 : index
    %28 = vector.load %arg4[%c0_23, %c0_24] : memref<8x16xf32, #tpu.memory_space<vmem>>, vector<8x16xf32>
    tpu.vector_store %arg4[%c0_23, %c0_24], %27 {strides = array<i32>} : memref<8x16xf32, #tpu.memory_space<vmem>>, vector<8x16xf32>,
    return
  }
}

</mosaic_0001>

<llo_original>
// kernel: tpu_custom_call.1
$region0: #{tpu_custom_call.1}
  #allocation0 [shape = 'u32[]', space=smem, size = 0x4, offset = 0x4, fixed_abs, tag = 'smem constant byte address 0x4 - core index']
  #allocation1 [shape = 'u32[144,128]{1,0:T(1,128)}', space=vmem, size = 0x12000, scoped, tag = 'internal scratch']
  %s0 = inlined_call_operand.hbm [shape: f32[8,8], index: 0, kind: input, shape index: {}]
  %s1 = inlined_call_operand.hbm [shape: f32[8,32], index: 1, kind: input, shape index: {}]
  %s2 = inlined_call_operand.hbm [shape: f32[3,32,32], index: 2, kind: input, shape index: {}]
  %s3 = inlined_call_operand.vmem [shape: f32[3,32], index: 3, kind: input, shape index: {}]
  %s4 = inlined_call_operand.hbm [shape: f32[8,16], index: 4, kind: output, shape index: {}]
  %s5 = sld [smem:[#allocation0]]
  $region38: #{tpu_custom_call.1} parent=0
    _
  %s7 = ssub.s32 1, %s5
  %s8 = scalar_select 0, %s7, %s5
  $region1: #{tpu_custom_call.1} parent=0
    #allocation2 [shape = 'u8[4096]{0}', space=vmem, size = 0x1000, scoped, tag = 'input window, operand 0, single buffered']
    #allocation3 [shape = 's32[1]{0}', space=sflag, size = 0x4, scoped, tag = 'scoped memory for tpu_custom_call.1']
    #allocation4 [shape = 's32[1]{0}', space=sflag, size = 0x4, scoped, tag = 'scoped memory for tpu_custom_call.1']
    #allocation5 [shape = 'u8[4096]{0}', space=vmem, size = 0x1000, scoped, tag = 'input window, operand 1, single buffered']
    #allocation6 [shape = 's32[1]{0}', space=sflag, size = 0x4, scoped, tag = 'scoped memory for tpu_custom_call.1']
    #allocation7 [shape = 'u8[49152]{0}', space=vmem, size = 0xc000, scoped, tag = 'input window, operand 2, single buffered']
    #allocation8 [shape = 'u8[4096]{0}', space=vmem, size = 0x1000, scoped, tag = 'output window, operand 0, single buffered']
    %9 = vsyncpa [#allocation3], 0
    %10 = vsyncpa [#allocation6], 0
    %11 = vsyncpa [#allocation4], 0
    // Predicated region
    $region2: #{tpu_custom_call.1} parent=1 // pred_check
      _
    $region3: #{tpu_custom_call.1} parent=1 // pred_check_branch
      %13 = sbr.rel (0) target = $region5
    $region4: #{tpu_custom_call.1} parent=1 // pred_region
      %s15 = ssub.s32 128, 128
      %16 = vsyncadd [#allocation3], %s15
      %s18 = sshll.u32 [#allocation2], 4
      %s19 = int_to_ptr.vmem [resolvable:$true] %s18
      %21 = dma.hbm_to_vmem [thread:$0]  %s0, 128, %s19, [#allocation3]
    $region5: #{tpu_custom_call.1} parent=1 // pred_fallthru
      _
    // Predicated region
    $region6: #{tpu_custom_call.1} parent=1 // pred_check
      _
    $region7: #{tpu_custom_call.1} parent=1 // pred_check_branch
      %23 = sbr.rel (0) target = $region9
    $region8: #{tpu_custom_call.1} parent=1 // pred_region
      %s25 = ssub.s32 128, 128
      %26 = vsyncadd [#allocation6], %s25
      %s28 = sshll.u32 [#allocation5], 4
      %s29 = int_to_ptr.vmem [resolvable:$true] %s28
      %31 = dma.hbm_to_vmem [thread:$0]  %s1, 128, %s29, [#allocation6]
    $region9: #{tpu_custom_call.1} parent=1 // pred_fallthru
      _
    // Predicated region
    $region10: #{tpu_custom_call.1} parent=1 // pred_check
      _
    $region11: #{tpu_custom_call.1} parent=1 // pred_check_branch
      %33 = sbr.rel (0) target = $region13
    $region12: #{tpu_custom_call.1} parent=1 // pred_region
      %s35 = ssub.s32 1536, 1536
      %36 = vsyncadd [#allocation6], %s35
      %s37 = sshll.u32 [#allocation7], 4
      %s38 = int_to_ptr.vmem [resolvable:$true] %s37
      %43 = dma.hbm_to_vmem [thread:$0]  %s2, 1536, %s38, [#allocation6], 128, 128, 8
    $region13: #{tpu_custom_call.1} parent=1 // pred_fallthru
      _
    // Predicated region
    $region14: #{tpu_custom_call.1} parent=1 // pred_check
      _
    $region15: #{tpu_custom_call.1} parent=1 // pred_check_branch
      %45 = sbr.rel (0) target = $region17
    $region16: #{tpu_custom_call.1} parent=1 // pred_region
      _
    $region17: #{tpu_custom_call.1} parent=1 // pred_fallthru
      _
    // Predicated region
    $region18: #{tpu_custom_call.1} parent=1 // pred_check
      _
    $region19: #{tpu_custom_call.1} parent=1 // pred_check_branch
      %47 = sbr.rel (0) target = $region21
    $region20: #{tpu_custom_call.1} parent=1 // pred_region
      %48 = dma.done [#allocation3], 128
    $region21: #{tpu_custom_call.1} parent=1 // pred_fallthru
      _
    // Predicated region
    $region22: #{tpu_custom_call.1} parent=1 // pred_check
      _
    $region23: #{tpu_custom_call.1} parent=1 // pred_check_branch
      %50 = sbr.rel (0) target = $region25
    $region24: #{tpu_custom_call.1} parent=1 // pred_region
      %51 = dma.done [#allocation6], 128
    $region25: #{tpu_custom_call.1} parent=1 // pred_fallthru
      _
    // Predicated region
    $region26: #{tpu_custom_call.1} parent=1 // pred_check
      _
    $region27: #{tpu_custom_call.1} parent=1 // pred_check_branch
      %53 = sbr.rel (0) target = $region29
    $region28: #{tpu_custom_call.1} parent=1 // pred_region
      %54 = dma.done [#allocation6], 1536
    $region29: #{tpu_custom_call.1} parent=1 // pred_fallthru
      _
    %v55 = vld [vmem:[#allocation2] sm:$0xff]
    %v56 = vld [vmem:[#allocation5] sm:$0xff]
    %v57 = vld [vmem:[#allocation7] sm:$0xff]
    %v58 = vld [vmem:[#allocation7 + $0x8] sm:$0xff]
    %v59 = vld [vmem:[#allocation7 + $0x10] sm:$0xff]
    %v60 = vld [vmem:[#allocation7 + $0x18] sm:$0xff]
    %v61 = vld [vmem:[%s3] sm:$0x1]
    %vm62 = vcmask 261120
    %v64 = vsel %vm62, %v56, 0
    %66 = vmatprep.subr.mxu0 0.0
    %67 = vmatpush1.msra.mxu0 %v57
    %68 = vmatprep.subr.mxu0 0.0
    %69 = vmatpush1.msra.mxu0 %v58
    %70 = vmatprep.subr.mxu0 0.0
    %71 = vmatpush1.msra.mxu0 %v59
    %72 = vmatprep.subr.mxu0 0.0
    %73 = vmatpush1.msra.mxu0 %v60
    %74 = vmatprep.subr.mxu0 0.0
    %75 = vmatpush1.msra.mxu0 0.0
    %76 = vmatprep.subr.mxu0 0.0
    %77 = vmatpush1.msra.mxu0 0.0
    %78 = vmatprep.subr.mxu0 0.0
    %79 = vmatpush1.msra.mxu0 0.0
    %80 = vmatprep.subr.mxu0 0.0
    %81 = vmatpush1.msra.mxu0 0.0
    %82 = vmatprep.subr.mxu0 0.0
    %83 = vmatpush1.msra.mxu0 0.0
    %84 = vmatprep.subr.mxu0 0.0
    %85 = vmatpush1.msra.mxu0 0.0
    %86 = vmatprep.subr.mxu0 0.0
    %87 = vmatpush1.msra.mxu0 0.0
    %88 = vmatprep.subr.mxu0 0.0
    %89 = vmatpush1.msra.mxu0 0.0
    %90 = vmatprep.subr.mxu0 0.0
    %91 = vmatpush1.msra.mxu0 0.0
    %92 = vmatprep.subr.mxu0 0.0
    %93 = vmatpush1.msra.mxu0 0.0
    %94 = vmatprep.subr.mxu0 0.0
    %95 = vmatpush1.msra.mxu0 0.0
    %96 = vmatprep.subr.mxu0 0.0
    %97 = vmatpush1.msra.mxu0 0.0
    %98 = vmatprep.subr.mxu0 0.0
    %99 = vmatpush1.msra.mxu0 0.0
    %100 = vmatprep.subr.mxu0 0.0
    %101 = vmatpush1.msra.mxu0 0.0
    %102 = vmatprep.subr.mxu0 0.0
    %103 = vmatpush1.msra.mxu0 0.0
    %104 = vmatprep.subr.mxu0 0.0
    %105 = vmatpush1.msra.mxu0 0.0
    %106 = vmatprep.subr.mxu0 0.0
    %107 = vmatpush1.msra.mxu0 0.0
    %108 = vmatprep.subr.mxu0 0.0
    %109 = vmatpush1.msra.mxu0 0.0
    %110 = vmatprep.subr.mxu0 0.0
    %111 = vmatpush1.msra.mxu0 0.0
    %112 = vmatprep.subr.mxu0 0.0
    %113 = vmatpush1.msra.mxu0 0.0
    %114 = vmatprep.subr.mxu0 0.0
    %115 = vmatpush1.msra.mxu0 0.0
    %116 = vmatprep.subr.mxu0 0.0
    %117 = vmatpush1.msra.mxu0 0.0
    %118 = vmatprep.subr.mxu0 0.0
    %119 = vmatpush1.msra.mxu0 0.0
    %120 = vmatprep.subr.mxu0 0.0
    %121 = vmatpush1.msra.mxu0 0.0
    %122 = vmatprep.subr.mxu0 0.0
    %123 = vmatpush1.msra.mxu0 0.0
    %124 = vmatprep.subr.mxu0 0.0
    %125 = vmatpush1.msra.mxu0 0.0
    %126 = vmatprep.subr.mxu0 0.0
    %127 = vmatpush1.msra.mxu0 0.0
    %128 = vmatprep.subr.mxu0 0.0
    %129 = vmatpush1.msra.mxu0 0.0
    %130 = vmatprep.mubr.f32.mxu0 0.0
    %131 = vmatmul.mubr.f32.gmra.mrb[0].mxu0 %v64
    %v132 = vpop.f32.mrb[0].mxu0
    %v133 = vadd.f32 0.0, %v132
    %v134 = vpop.f32.mrb[0].mxu0
    %135 = vdwg.mxu0
    %v136 = vlaneseq
    %v137 = vshrl.u32 %v136, 7
    %v138 = vsub.s32 0, %v137
    %v139 = vrot.slane %v61, %v138
    %vm140 = vcmask 64512
    %v142 = vsel %vm140, %v55, 0
    %144 = vmatprep.subr.mxu0 0.0
    %145 = vmatpush1.msra.mxu0 %v133
    %146 = vmatprep.subr.mxu0 0.0
    %147 = vmatpush1.msra.mxu0 0.0
    %148 = vmatprep.subr.mxu0 0.0
    %149 = vmatpush1.msra.mxu0 0.0
    %150 = vmatprep.subr.mxu0 0.0
    %151 = vmatpush1.msra.mxu0 0.0
    %152 = vmatprep.subr.mxu0 0.0
    %153 = vmatpush1.msra.mxu0 0.0
    %154 = vmatprep.subr.mxu0 0.0
    %155 = vmatpush1.msra.mxu0 0.0
    %156 = vmatprep.subr.mxu0 0.0
    %157 = vmatpush1.msra.mxu0 0.0
    %158 = vmatprep.subr.mxu0 0.0
    %159 = vmatpush1.msra.mxu0 0.0
    %160 = vmatprep.subr.mxu0 0.0
    %161 = vmatpush1.msra.mxu0 0.0
    %162 = vmatprep.subr.mxu0 0.0
    %163 = vmatpush1.msra.mxu0 0.0
    %164 = vmatprep.subr.mxu0 0.0
    %165 = vmatpush1.msra.mxu0 0.0
    %166 = vmatprep.subr.mxu0 0.0
    %167 = vmatpush1.msra.mxu0 0.0
    %168 = vmatprep.subr.mxu0 0.0
    %169 = vmatpush1.msra.mxu0 0.0
    %170 = vmatprep.subr.mxu0 0.0
    %171 = vmatpush1.msra.mxu0 0.0
    %172 = vmatprep.subr.mxu0 0.0
    %173 = vmatpush1.msra.mxu0 0.0
    %174 = vmatprep.subr.mxu0 0.0
    %175 = vmatpush1.msra.mxu0 0.0
    %176 = vmatprep.subr.mxu0 0.0
    %177 = vmatpush1.msra.mxu0 0.0
    %178 = vmatprep.subr.mxu0 0.0
    %179 = vmatpush1.msra.mxu0 0.0
    %180 = vmatprep.subr.mxu0 0.0
    %181 = vmatpush1.msra.mxu0 0.0
    %182 = vmatprep.subr.mxu0 0.0
    %183 = vmatpush1.msra.mxu0 0.0
    %184 = vmatprep.subr.mxu0 0.0
    %185 = vmatpush1.msra.mxu0 0.0
    %186 = vmatprep.subr.mxu0 0.0
    %187 = vmatpush1.msra.mxu0 0.0
    %188 = vmatprep.subr.mxu0 0.0
    %189 = vmatpush1.msra.mxu0 0.0
    %190 = vmatprep.subr.mxu0 0.0
    %191 = vmatpush1.msra.mxu0 0.0
    %192 = vmatprep.subr.mxu0 0.0
    %193 = vmatpush1.msra.mxu0 0.0
    %194 = vmatprep.subr.mxu0 0.0
    %195 = vmatpush1.msra.mxu0 0.0
    %196 = vmatprep.subr.mxu0 0.0
    %197 = vmatpush1.msra.mxu0 0.0
    %198 = vmatprep.subr.mxu0 0.0
    %199 = vmatpush1.msra.mxu0 0.0
    %200 = vmatprep.subr.mxu0 0.0
    %201 = vmatpush1.msra.mxu0 0.0
    %202 = vmatprep.subr.mxu0 0.0
    %203 = vmatpush1.msra.mxu0 0.0
    %204 = vmatprep.subr.mxu0 0.0
    %205 = vmatpush1.msra.mxu0 0.0
    %206 = vmatprep.subr.mxu0 0.0
    %207 = vmatpush1.msra.mxu0 0.0
    %208 = vmatprep.mubr.f32.mxu0 0.0
    %209 = vmatmul.mubr.f32.gmra.mrb[0].mxu0 %v142
    %v210 = vpop.f32.mrb[0].mxu0
    %v211 = vadd.f32 %v139, %v210
    %v212 = vpop.f32.mrb[0].mxu0
    %213 = vdwg.mxu0
    %v214 = vmax.f32 %v211, 0.0
    %s215 = scalar_lea.vmem [#allocation7], 32
    %v216 = vld [vmem:[%s215] sm:$0xff]
    %v217 = vld [vmem:[%s215 + $0x8] sm:$0xff]
    %v218 = vld [vmem:[%s215 + $0x10] sm:$0xff]
    %v219 = vld [vmem:[%s215 + $0x18] sm:$0xff]
    %v220 = vld [vmem:[%s3 + $0x1] sm:$0x1]
    %v222 = vsel %vm62, %v214, 0
    %224 = vmatprep.subr.mxu0 0.0
    %225 = vmatpush1.msra.mxu0 %v216
    %226 = vmatprep.subr.mxu0 0.0
    %227 = vmatpush1.msra.mxu0 %v217
    %228 = vmatprep.subr.mxu0 0.0
    %229 = vmatpush1.msra.mxu0 %v218
    %230 = vmatprep.subr.mxu0 0.0
    %231 = vmatpush1.msra.mxu0 %v219
    %232 = vmatprep.subr.mxu0 0.0
    %233 = vmatpush1.msra.mxu0 0.0
    %234 = vmatprep.subr.mxu0 0.0
    %235 = vmatpush1.msra.mxu0 0.0
    %236 = vmatprep.subr.mxu0 0.0
    %237 = vmatpush1.msra.mxu0 0.0
    %238 = vmatprep.subr.mxu0 0.0
    %239 = vmatpush1.msra.mxu0 0.0
    %240 = vmatprep.subr.mxu0 0.0
    %241 = vmatpush1.msra.mxu0 0.0
    %242 = vmatprep.subr.mxu0 0.0
    %243 = vmatpush1.msra.mxu0 0.0
    %244 = vmatprep.subr.mxu0 0.0
    %245 = vmatpush1.msra.mxu0 0.0
    %246 = vmatprep.subr.mxu0 0.0
    %247 = vmatpush1.msra.mxu0 0.0
    %248 = vmatprep.subr.mxu0 0.0
    %249 = vmatpush1.msra.mxu0 0.0
    %250 = vmatprep.subr.mxu0 0.0
    %251 = vmatpush1.msra.mxu0 0.0
    %252 = vmatprep.subr.mxu0 0.0
    %253 = vmatpush1.msra.mxu0 0.0
    %254 = vmatprep.subr.mxu0 0.0
    %255 = vmatpush1.msra.mxu0 0.0
    %256 = vmatprep.subr.mxu0 0.0
    %257 = vmatpush1.msra.mxu0 0.0
    %258 = vmatprep.subr.mxu0 0.0
    %259 = vmatpush1.msra.mxu0 0.0
    %260 = vmatprep.subr.mxu0 0.0
    %261 = vmatpush1.msra.mxu0 0.0
    %262 = vmatprep.subr.mxu0 0.0
    %263 = vmatpush1.msra.mxu0 0.0
    %264 = vmatprep.subr.mxu0 0.0
    %265 = vmatpush1.msra.mxu0 0.0
    %266 = vmatprep.subr.mxu0 0.0
    %267 = vmatpush1.msra.mxu0 0.0
    %268 = vmatprep.subr.mxu0 0.0
    %269 = vmatpush1.msra.mxu0 0.0
    %270 = vmatprep.subr.mxu0 0.0
    %271 = vmatpush1.msra.mxu0 0.0
    %272 = vmatprep.subr.mxu0 0.0
    %273 = vmatpush1.msra.mxu0 0.0
    %274 = vmatprep.subr.mxu0 0.0
    %275 = vmatpush1.msra.mxu0 0.0
    %276 = vmatprep.subr.mxu0 0.0
    %277 = vmatpush1.msra.mxu0 0.0
    %278 = vmatprep.subr.mxu0 0.0
    %279 = vmatpush1.msra.mxu0 0.0
    %280 = vmatprep.subr.mxu0 0.0
    %281 = vmatpush1.msra.mxu0 0.0
    %282 = vmatprep.subr.mxu0 0.0
    %283 = vmatpush1.msra.mxu0 0.0
    %284 = vmatprep.subr.mxu0 0.0
    %285 = vmatpush1.msra.mxu0 0.0
    %286 = vmatprep.subr.mxu0 0.0
    %287 = vmatpush1.msra.mxu0 0.0
    %288 = vmatprep.mubr.f32.mxu0 0.0
    %289 = vmatmul.mubr.f32.gmra.mrb[0].mxu0 %v222
    %v290 = vpop.f32.mrb[0].mxu0
    %v291 = vadd.f32 0.0, %v290
    %v292 = vpop.f32.mrb[0].mxu0
    %293 = vdwg.mxu0
    %v294 = vlaneseq
    %v295 = vshrl.u32 %v294, 7
    %v296 = vsub.s32 0, %v295
    %v297 = vrot.slane %v220, %v296
    %298 = vmatprep.subr.mxu0 0.0
    %299 = vmatpush1.msra.mxu0 %v291
    %300 = vmatprep.subr.mxu0 0.0
    %301 = vmatpush1.msra.mxu0 0.0
    %302 = vmatprep.subr.mxu0 0.0
    %303 = vmatpush1.msra.mxu0 0.0
    %304 = vmatprep.subr.mxu0 0.0
    %305 = vmatpush1.msra.mxu0 0.0
    %306 = vmatprep.subr.mxu0 0.0
    %307 = vmatpush1.msra.mxu0 0.0
    %308 = vmatprep.subr.mxu0 0.0
    %309 = vmatpush1.msra.mxu0 0.0
    %310 = vmatprep.subr.mxu0 0.0
    %311 = vmatpush1.msra.mxu0 0.0
    %312 = vmatprep.subr.mxu0 0.0
    %313 = vmatpush1.msra.mxu0 0.0
    %314 = vmatprep.subr.mxu0 0.0
    %315 = vmatpush1.msra.mxu0 0.0
    %316 = vmatprep.subr.mxu0 0.0
    %317 = vmatpush1.msra.mxu0 0.0
    %318 = vmatprep.subr.mxu0 0.0
    %319 = vmatpush1.msra.mxu0 0.0
    %320 = vmatprep.subr.mxu0 0.0
    %321 = vmatpush1.msra.mxu0 0.0
    %322 = vmatprep.subr.mxu0 0.0
    %323 = vmatpush1.msra.mxu0 0.0
    %324 = vmatprep.subr.mxu0 0.0
    %325 = vmatpush1.msra.mxu0 0.0
    %326 = vmatprep.subr.mxu0 0.0
    %327 = vmatpush1.msra.mxu0 0.0
    %328 = vmatprep.subr.mxu0 0.0
    %329 = vmatpush1.msra.mxu0 0.0
    %330 = vmatprep.subr.mxu0 0.0
    %331 = vmatpush1.msra.mxu0 0.0
    %332 = vmatprep.subr.mxu0 0.0
    %333 = vmatpush1.msra.mxu0 0.0
    %334 = vmatprep.subr.mxu0 0.0
    %335 = vmatpush1.msra.mxu0 0.0
    %336 = vmatprep.subr.mxu0 0.0
    %337 = vmatpush1.msra.mxu0 0.0
    %338 = vmatprep.subr.mxu0 0.0
    %339 = vmatpush1.msra.mxu0 0.0
    %340 = vmatprep.subr.mxu0 0.0
    %341 = vmatpush1.msra.mxu0 0.0
    %342 = vmatprep.subr.mxu0 0.0
    %343 = vmatpush1.msra.mxu0 0.0
    %344 = vmatprep.subr.mxu0 0.0
    %345 = vmatpush1.msra.mxu0 0.0
    %346 = vmatprep.subr.mxu0 0.0
    %347 = vmatpush1.msra.mxu0 0.0
    %348 = vmatprep.subr.mxu0 0.0
    %349 = vmatpush1.msra.mxu0 0.0
    %350 = vmatprep.subr.mxu0 0.0
    %351 = vmatpush1.msra.mxu0 0.0
    %352 = vmatprep.subr.mxu0 0.0
    %353 = vmatpush1.msra.mxu0 0.0
    %354 = vmatprep.subr.mxu0 0.0
    %355 = vmatpush1.msra.mxu0 0.0
    %356 = vmatprep.subr.mxu0 0.0
    %357 = vmatpush1.msra.mxu0 0.0
    %358 = vmatprep.subr.mxu0 0.0
    %359 = vmatpush1.msra.mxu0 0.0
    %360 = vmatprep.subr.mxu0 0.0
    %361 = vmatpush1.msra.mxu0 0.0
    %362 = vmatprep.mubr.f32.mxu0 0.0
    %363 = vmatmul.mubr.f32.gmra.mrb[0].mxu0 %v142
    %v364 = vpop.f32.mrb[0].mxu0
    %v365 = vadd.f32 %v297, %v364
    %v366 = vpop.f32.mrb[0].mxu0
    %367 = vdwg.mxu0
    %v368 = vmax.f32 %v365, 0.0
    %s369 = scalar_lea.vmem [#allocation7], 64
    %v370 = vld [vmem:[%s369] sm:$0xff]
    %v371 = vld [vmem:[%s369 + $0x8] sm:$0xff]
    %v372 = vld [vmem:[%s369 + $0x10] sm:$0xff]
    %v373 = vld [vmem:[%s369 + $0x18] sm:$0xff]
    %v374 = vld [vmem:[%s3 + $0x2] sm:$0x1]
    %v376 = vsel %vm62, %v368, 0
    %378 = vmatprep.subr.mxu0 0.0
    %379 = vmatpush1.msra.mxu0 %v370
    %380 = vmatprep.subr.mxu0 0.0
    %381 = vmatpush1.msra.mxu0 %v371
    %382 = vmatprep.subr.mxu0 0.0
    %383 = vmatpush1.msra.mxu0 %v372
    %384 = vmatprep.subr.mxu0 0.0
    %385 = vmatpush1.msra.mxu0 %v373
    %386 = vmatprep.subr.mxu0 0.0
    %387 = vmatpush1.msra.mxu0 0.0
    %388 = vmatprep.subr.mxu0 0.0
    %389 = vmatpush1.msra.mxu0 0.0
    %390 = vmatprep.subr.mxu0 0.0
    %391 = vmatpush1.msra.mxu0 0.0
    %392 = vmatprep.subr.mxu0 0.0
    %393 = vmatpush1.msra.mxu0 0.0
    %394 = vmatprep.subr.mxu0 0.0
    %395 = vmatpush1.msra.mxu0 0.0
    %396 = vmatprep.subr.mxu0 0.0
    %397 = vmatpush1.msra.mxu0 0.0
    %398 = vmatprep.subr.mxu0 0.0
    %399 = vmatpush1.msra.mxu0 0.0
    %400 = vmatprep.subr.mxu0 0.0
    %401 = vmatpush1.msra.mxu0 0.0
    %402 = vmatprep.subr.mxu0 0.0
    %403 = vmatpush1.msra.mxu0 0.0
    %404 = vmatprep.subr.mxu0 0.0
    %405 = vmatpush1.msra.mxu0 0.0
    %406 = vmatprep.subr.mxu0 0.0
    %407 = vmatpush1.msra.mxu0 0.0
    %408 = vmatprep.subr.mxu0 0.0
    %409 = vmatpush1.msra.mxu0 0.0
    %410 = vmatprep.subr.mxu0 0.0
    %411 = vmatpush1.msra.mxu0 0.0
    %412 = vmatprep.subr.mxu0 0.0
    %413 = vmatpush1.msra.mxu0 0.0
    %414 = vmatprep.subr.mxu0 0.0
    %415 = vmatpush1.msra.mxu0 0.0
    %416 = vmatprep.subr.mxu0 0.0
    %417 = vmatpush1.msra.mxu0 0.0
    %418 = vmatprep.subr.mxu0 0.0
    %419 = vmatpush1.msra.mxu0 0.0
    %420 = vmatprep.subr.mxu0 0.0
    %421 = vmatpush1.msra.mxu0 0.0
    %422 = vmatprep.subr.mxu0 0.0
    %423 = vmatpush1.msra.mxu0 0.0
    %424 = vmatprep.subr.mxu0 0.0
    %425 = vmatpush1.msra.mxu0 0.0
    %426 = vmatprep.subr.mxu0 0.0
    %427 = vmatpush1.msra.mxu0 0.0
    %428 = vmatprep.subr.mxu0 0.0
    %429 = vmatpush1.msra.mxu0 0.0
    %430 = vmatprep.subr.mxu0 0.0
    %431 = vmatpush1.msra.mxu0 0.0
    %432 = vmatprep.subr.mxu0 0.0
    %433 = vmatpush1.msra.mxu0 0.0
    %434 = vmatprep.subr.mxu0 0.0
    %435 = vmatpush1.msra.mxu0 0.0
    %436 = vmatprep.subr.mxu0 0.0
    %437 = vmatpush1.msra.mxu0 0.0
    %438 = vmatprep.subr.mxu0 0.0
    %439 = vmatpush1.msra.mxu0 0.0
    %440 = vmatprep.subr.mxu0 0.0
    %441 = vmatpush1.msra.mxu0 0.0
    %442 = vmatprep.mubr.f32.mxu0 0.0
    %443 = vmatmul.mubr.f32.gmra.mrb[0].mxu0 %v376
    %v444 = vpop.f32.mrb[0].mxu0
    %v445 = vadd.f32 0.0, %v444
    %v446 = vpop.f32.mrb[0].mxu0
    %447 = vdwg.mxu0
    %v448 = vlaneseq
    %v449 = vshrl.u32 %v448, 7
    %v450 = vsub.s32 0, %v449
    %v451 = vrot.slane %v374, %v450
    %452 = vmatprep.subr.mxu0 0.0
    %453 = vmatpush1.msra.mxu0 %v445
    %454 = vmatprep.subr.mxu0 0.0
    %455 = vmatpush1.msra.mxu0 0.0
    %456 = vmatprep.subr.mxu0 0.0
    %457 = vmatpush1.msra.mxu0 0.0
    %458 = vmatprep.subr.mxu0 0.0
    %459 = vmatpush1.msra.mxu0 0.0
    %460 = vmatprep.subr.mxu0 0.0
    %461 = vmatpush1.msra.mxu0 0.0
    %462 = vmatprep.subr.mxu0 0.0
    %463 = vmatpush1.msra.mxu0 0.0
    %464 = vmatprep.subr.mxu0 0.0
    %465 = vmatpush1.msra.mxu0 0.0
    %466 = vmatprep.subr.mxu0 0.0
    %467 = vmatpush1.msra.mxu0 0.0
    %468 = vmatprep.subr.mxu0 0.0
    %469 = vmatpush1.msra.mxu0 0.0
    %470 = vmatprep.subr.mxu0 0.0
    %471 = vmatpush1.msra.mxu0 0.0
    %472 = vmatprep.subr.mxu0 0.0
    %473 = vmatpush1.msra.mxu0 0.0
    %474 = vmatprep.subr.mxu0 0.0
    %475 = vmatpush1.msra.mxu0 0.0
    %476 = vmatprep.subr.mxu0 0.0
    %477 = vmatpush1.msra.mxu0 0.0
    %478 = vmatprep.subr.mxu0 0.0
    %479 = vmatpush1.msra.mxu0 0.0
    %480 = vmatprep.subr.mxu0 0.0
    %481 = vmatpush1.msra.mxu0 0.0
    %482 = vmatprep.subr.mxu0 0.0
    %483 = vmatpush1.msra.mxu0 0.0
    %484 = vmatprep.subr.mxu0 0.0
    %485 = vmatpush1.msra.mxu0 0.0
    %486 = vmatprep.subr.mxu0 0.0
    %487 = vmatpush1.msra.mxu0 0.0
    %488 = vmatprep.subr.mxu0 0.0
    %489 = vmatpush1.msra.mxu0 0.0
    %490 = vmatprep.subr.mxu0 0.0
    %491 = vmatpush1.msra.mxu0 0.0
    %492 = vmatprep.subr.mxu0 0.0
    %493 = vmatpush1.msra.mxu0 0.0
    %494 = vmatprep.subr.mxu0 0.0
    %495 = vmatpush1.msra.mxu0 0.0
    %496 = vmatprep.subr.mxu0 0.0
    %497 = vmatpush1.msra.mxu0 0.0
    %498 = vmatprep.subr.mxu0 0.0
    %499 = vmatpush1.msra.mxu0 0.0
    %500 = vmatprep.subr.mxu0 0.0
    %501 = vmatpush1.msra.mxu0 0.0
    %502 = vmatprep.subr.mxu0 0.0
    %503 = vmatpush1.msra.mxu0 0.0
    %504 = vmatprep.subr.mxu0 0.0
    %505 = vmatpush1.msra.mxu0 0.0
    %506 = vmatprep.subr.mxu0 0.0
    %507 = vmatpush1.msra.mxu0 0.0
    %508 = vmatprep.subr.mxu0 0.0
    %509 = vmatpush1.msra.mxu0 0.0
    %510 = vmatprep.subr.mxu0 0.0
    %511 = vmatpush1.msra.mxu0 0.0
    %512 = vmatprep.subr.mxu0 0.0
    %513 = vmatpush1.msra.mxu0 0.0
    %514 = vmatprep.subr.mxu0 0.0
    %515 = vmatpush1.msra.mxu0 0.0
    %516 = vmatprep.mubr.f32.mxu0 0.0
    %517 = vmatmul.mubr.f32.gmra.mrb[0].mxu0 %v142
    %v518 = vpop.f32.mrb[0].mxu0
    %v519 = vadd.f32 %v451, %v518
    %v520 = vpop.f32.mrb[0].mxu0
    %521 = vdwg.mxu0
    %vm522 = vcmask 130048
    %523 = vst.msk [vmem:[#allocation8] sm:$0xff] %vm522, %v519
    // Predicated region
    $region30: #{tpu_custom_call.1} parent=1 // pred_check
      _
    $region31: #{tpu_custom_call.1} parent=1 // pred_check_branch
      %525 = sbr.rel (0) target = $region33
    $region32: #{tpu_custom_call.1} parent=1 // pred_region
      %s527 = ssub.s32 128, 128
      %528 = vsyncadd [#allocation4], %s527
      %s530 = sshll.u32 [#allocation8], 4
      %s531 = int_to_ptr.vmem [resolvable:$true] %s530
      %533 = dma.vmem_to_hbm [thread:$0]  %s531, 128, %s4, [#allocation4]
    $region33: #{tpu_custom_call.1} parent=1 // pred_fallthru
      _
    // Predicated region
    $region34: #{tpu_custom_call.1} parent=1 // pred_check
      _
    $region35: #{tpu_custom_call.1} parent=1 // pred_check_branch
      %535 = sbr.rel (0) target = $region37
    $region36: #{tpu_custom_call.1} parent=1 // pred_region
      %536 = dma.done [#allocation4], 128
    $region37: #{tpu_custom_call.1} parent=1 // pred_fallthru
      _
    %537 = vsyncpa [#allocation3], 1
    %538 = vsyncpa [#allocation6], 1
    %539 = vsyncpa [#allocation4], 1

</llo_original>
